<compile_context>
chip_gen: v7x
topology: tpu7x:2x2x1
jax: 0.10.0
libtpu: 0.0.40
codegen_flags: <defaults>
</compile_context>

<pallas_src>
import functools

import jax
import jax.numpy as jnp
from jax import lax
from jax.experimental import pallas as pl
from jax.experimental.pallas import tpu as pltpu


_LANE = 128                 # TPU vreg lane width
_TILE_BUDGET = 16 << 20     # VMEM budget per grid step (double-buffered tiles + temps)
_VMEM_LIMIT = 48 << 20      # < 64 MiB v7x physical; fine on v5e/v6e (128 MiB)


def _round_up(a, b):
    return -(-a // b) * b


def _edge_pad(a, axis, lo, hi):
    """Replicate ('edge') padding along one axis, computed in registers."""
    if lo == 0 and hi == 0:
        return a
    parts = []
    if lo:
        shape = list(a.shape)
        shape[axis] = lo
        parts.append(jnp.broadcast_to(lax.slice_in_dim(a, 0, 1, axis=axis), shape))
    parts.append(a)
    if hi:
        shape = list(a.shape)
        shape[axis] = hi
        n = a.shape[axis]
        parts.append(jnp.broadcast_to(lax.slice_in_dim(a, n - 1, n, axis=axis), shape))
    return jnp.concatenate(parts, axis=axis)


def _pool_body(x, *, k1, k2, h_out, w_out, pads, inv_area, h_axis, w_axis):
    """Separable stride-1 box average + fused replicate padding.

    Row (W) pass then column (H) pass: k1 + k2 - 2 shifted adds instead of the
    k1*k2 - 1 adds of the direct formulation.  All slice offsets are static.
    """
    # Row (W) pass — accumulator initialized from the first term (no zeros+add).
    rs = lax.slice_in_dim(x, 0, w_out, axis=w_axis)
    for dj in range(1, k2):
        rs = rs + lax.slice_in_dim(x, dj, dj + w_out, axis=w_axis)
    # Column (H) pass.
    acc = lax.slice_in_dim(rs, 0, h_out, axis=h_axis)
    for di in range(1, k1):
        acc = acc + lax.slice_in_dim(rs, di, di + h_out, axis=h_axis)
    out = acc * inv_area  # single scale per tile (f32 accumulation throughout)
    # Fused replicate padding (kills the separate jnp.pad HBM round trip).
    pad_t, pad_b, pad_l, pad_r = pads
    out = _edge_pad(out, w_axis, pad_l, pad_r)
    out = _edge_pad(out, h_axis, pad_t, pad_b)
    return out


def _avgpool_kernel_cl(x_ref, o_ref, **kw):
    # channels-last block: (H, W, CH) — CH sits on the 128-wide lane axis.
    x = x_ref[...].astype(jnp.float32)
    o_ref[...] = _pool_body(x, h_axis=0, w_axis=1, **kw).astype(o_ref.dtype)


def _avgpool_kernel_cf(x_ref, o_ref, **kw):
    # channels-first block: (CH, H, W) — used when W is already lane-dense or
    # the full-spatial lane-dense tile would not fit the VMEM budget.
    x = x_ref[...].astype(jnp.float32)
    o_ref[...] = _pool_body(x, h_axis=1, w_axis=2, **kw).astype(o_ref.dtype)


def avg_pool2d(x, kernel_size=None, base_size=None, auto_pad=True,
               fast_imp=False, train_size=None):
    """JAX/Pallas port of AvgPool2d.forward (fast_imp=False path)."""
    n, c, h, w = x.shape

    if kernel_size is None and base_size is not None:
        if isinstance(base_size, int):
            base_size = (base_size, base_size)
        # max(1, ...): guard against integer division producing a 0 kernel size.
        kernel_size = [max(1, h * base_size[0] // train_size[-2]),
                       max(1, w * base_size[1] // train_size[-1])]
    if isinstance(kernel_size, int):
        kernel_size = (kernel_size, kernel_size)

    # Global-average branch (adaptive_avg_pool2d(x, 1)).
    if kernel_size[0] >= h and kernel_size[1] >= w:
        return jnp.mean(x, axis=(2, 3), keepdims=True)

    if fast_imp:
        # TODO(synk): fast_imp=True path (strided subsample + cumsum + nearest
        # interpolate) not implemented; default module config uses fast_imp=False.
        raise NotImplementedError("fast_imp path not implemented")

    k1 = min(h, kernel_size[0])
    k2 = min(w, kernel_size[1])
    h_out = h - k1 + 1
    w_out = w - k2 + 1

    if auto_pad:
        pad_l, pad_r = (w - w_out) // 2, (w - w_out + 1) // 2
        pad_t, pad_b = (h - h_out) // 2, (h - h_out + 1) // 2
        oh, ow = h, w
    else:
        pad_l = pad_r = pad_t = pad_b = 0
        oh, ow = h_out, w_out

    nc = n * c
    itemsize = jnp.dtype(x.dtype).itemsize
    # Per-channel VMEM footprint: double-buffered in+out tiles plus ~4 f32 temps.
    per_ch = h * w * (4 * itemsize + 4 * 4)
    max_ch = max(0, _TILE_BUDGET // per_ch)

    kern_kw = dict(k1=k1, k2=k2, h_out=h_out, w_out=w_out,
                   pads=(pad_t, pad_b, pad_l, pad_r),
                   inv_area=1.0 / float(k1 * k2))
    cparams = pltpu.CompilerParams(dimension_semantics=("parallel",),
                                   vmem_limit_bytes=_VMEM_LIMIT)

    # Lane-dense channels-last layout is worth a wrapper transpose when W < 128
    # and a full-spatial chunk of >= min(nc, 128) channels fits the VMEM budget.
    use_channels_last = (w < _LANE) and (max_ch >= min(nc, _LANE))

    if use_channels_last:
        if nc <= _LANE:
            ch, nc_pad = nc, nc          # block spans the full channel extent
        else:
            # Chunks are multiples of 128 lanes; keep >= 2 grid steps (v7x 2 TCs).
            target = max(_LANE, (_round_up(nc, _LANE) // 2) // _LANE * _LANE)
            ch = max(_LANE, (min(max_ch, target) // _LANE) * _LANE)
            nc_pad = _round_up(nc, ch)
        xr = jnp.transpose(x.reshape(nc, h, w), (1, 2, 0))       # (H, W, NC)
        if nc_pad != nc:
            xr = jnp.pad(xr, ((0, 0), (0, 0), (0, nc_pad - nc)))
        out = pl.pallas_call(
            functools.partial(_avgpool_kernel_cl, **kern_kw),
            out_shape=jax.ShapeDtypeStruct((oh, ow, nc_pad), x.dtype),
            grid=(nc_pad // ch,),
            in_specs=[pl.BlockSpec((h, w, ch), lambda i: (0, 0, i))],
            out_specs=pl.BlockSpec((oh, ow, ch), lambda i: (0, 0, i)),
            compiler_params=cparams,
        )(xr)
        if nc_pad != nc:
            out = out[:, :, :nc]
        out = jnp.transpose(out, (2, 0, 1)).reshape(n, c, oh, ow)
    else:
        # Channels-first fallback: W already >= 128 lanes, or full-spatial
        # lane-dense tiles do not fit VMEM.  Chunk channels to the budget and
        # keep >= 2 grid steps where possible.
        # TODO(synk): spatial (H) tiling with a (k1-1) halo for images whose
        # full spatial extent does not fit VMEM even at ch=1.
        half = _round_up(nc, 2) // 2 if nc >= 2 else nc
        ch = max(1, min(max_ch if max_ch > 0 else 1, half))
        nc_pad = _round_up(nc, ch)
        xr = x.reshape(nc, h, w)
        if nc_pad != nc:
            xr = jnp.pad(xr, ((0, nc_pad - nc), (0, 0), (0, 0)))
        out = pl.pallas_call(
            functools.partial(_avgpool_kernel_cf, **kern_kw),
            out_shape=jax.ShapeDtypeStruct((nc_pad, oh, ow), x.dtype),
            grid=(nc_pad // ch,),
            in_specs=[pl.BlockSpec((ch, h, w), lambda i: (i, 0, 0))],
            out_specs=pl.BlockSpec((ch, oh, ow), lambda i: (i, 0, 0)),
            compiler_params=cparams,
        )(xr)
        out = out[:nc].reshape(n, c, oh, ow)
    return out


def _reference(x, kernel_size, auto_pad=True):
    """Pure-JAX reference mirroring the PyTorch integral-image code."""
    n, c, h, w = x.shape
    k1 = min(h, kernel_size[0])
    k2 = min(w, kernel_size[1])
    if kernel_size[0] >= h and kernel_size[1] >= w:
        return jnp.mean(x, axis=(2, 3), keepdims=True)
    s = jnp.cumsum(jnp.cumsum(x.astype(jnp.float32), axis=-1), axis=-2)
    s = jnp.pad(s, ((0, 0), (0, 0), (1, 0), (1, 0)))
    s1 = s[:, :, :-k1, :-k2]
    s2 = s[:, :, :-k1, k2:]
    s3 = s[:, :, k1:, :-k2]
    s4 = s[:, :, k1:, k2:]
    out = (s4 + s1 - s2 - s3) / (k1 * k2)
    if auto_pad:
        _h, _w = out.shape[2:]
        out = jnp.pad(out, ((0, 0), (0, 0),
                            ((h - _h) // 2, (h - _h + 1) // 2),
                            ((w - _w) // 2, (w - _w + 1) // 2)), mode='edge')
    return out.astype(x.dtype)


if __name__ == "__main__":
    # Case 1: toy shape from the module spec (single lane-dense block, grid=1).
    n, c, h, w = 2, 4, 16, 16
    x = jax.random.normal(jax.random.PRNGKey(0), (n, c, h, w), dtype=jnp.float32)
    out = jax.block_until_ready(avg_pool2d(x, kernel_size=(7, 7), auto_pad=True))
    assert out.shape == (n, c, h, w), out.shape
    assert out.dtype == x.dtype, out.dtype
    ref = _reference(x, (7, 7), auto_pad=True)
    assert jnp.allclose(out, ref, atol=1e-4, rtol=1e-4), \
        float(jnp.max(jnp.abs(out - ref)))

    # Case 2: enough channels to exercise lane-padded, multi-step chunking
    # (nc = 320 -> channel chunks of 128, padded to 384, grid of 3 parallel steps).
    ks = (5, 7)
    n2, c2 = 2, 160
    x2 = jax.random.normal(jax.random.PRNGKey(1), (n2, c2, 16, 16), dtype=jnp.float32)
    out2 = jax.block_until_ready(avg_pool2d(x2, kernel_size=ks, auto_pad=True))
    assert out2.shape == (n2, c2, 16, 16), out2.shape
    ref2 = _reference(x2, ks, auto_pad=True)
    assert jnp.allclose(out2, ref2, atol=1e-4, rtol=1e-4), \
        float(jnp.max(jnp.abs(out2 - ref2)))

    print("KERNEL_OK")
</pallas_src>

<mosaic_0001>
module attributes {stable_mosaic.version = 11 : i64} {
  func.func @_avgpool_kernel_cl(%arg0: i32, %arg1: memref<16x16x8xf32, #tpu.memory_space<vmem>>, %arg2: memref<16x16x8xf32, #tpu.memory_space<vmem>>) attributes {dimension_semantics = [#tpu.dimension_semantics<parallel>], iteration_bounds = array<i64: 1>, scalar_prefetch = 0 : i64, scratch_operands = 0 : i64, tpu.core_type = #tpu.core_type<tc>, window_params = [{transform_indices = @transform_0, window_bounds = array<i64: 16, 16, 8>}, {transform_indices = @transform_1, window_bounds = array<i64: 16, 16, 8>}]} {
    %c0 = arith.constant 0 : index
    %c0_0 = arith.constant 0 : index
    %c0_1 = arith.constant 0 : index
    %0 = vector.load %arg1[%c0, %c0_0, %c0_1] : memref<16x16x8xf32, #tpu.memory_space<vmem>>, vector<16x16x8xf32>
    %1 = vector.extract_strided_slice %0 {offsets = [0, 0, 0], sizes = [16, 10, 8], strides = [1, 1, 1]} : vector<16x16x8xf32> to vector<16x10x8xf32>
    %2 = vector.extract_strided_slice %0 {offsets = [0, 1, 0], sizes = [16, 10, 8], strides = [1, 1, 1]} : vector<16x16x8xf32> to vector<16x10x8xf32>
    %3 = arith.addf %1, %2 : vector<16x10x8xf32>
    %4 = vector.extract_strided_slice %0 {offsets = [0, 2, 0], sizes = [16, 10, 8], strides = [1, 1, 1]} : vector<16x16x8xf32> to vector<16x10x8xf32>
    %5 = arith.addf %3, %4 : vector<16x10x8xf32>
    %6 = vector.extract_strided_slice %0 {offsets = [0, 3, 0], sizes = [16, 10, 8], strides = [1, 1, 1]} : vector<16x16x8xf32> to vector<16x10x8xf32>
    %7 = arith.addf %5, %6 : vector<16x10x8xf32>
    %8 = vector.extract_strided_slice %0 {offsets = [0, 4, 0], sizes = [16, 10, 8], strides = [1, 1, 1]} : vector<16x16x8xf32> to vector<16x10x8xf32>
    %9 = arith.addf %7, %8 : vector<16x10x8xf32>
    %10 = vector.extract_strided_slice %0 {offsets = [0, 5, 0], sizes = [16, 10, 8], strides = [1, 1, 1]} : vector<16x16x8xf32> to vector<16x10x8xf32>
    %11 = arith.addf %9, %10 : vector<16x10x8xf32>
    %12 = vector.extract_strided_slice %0 {offsets = [0, 6, 0], sizes = [16, 10, 8], strides = [1, 1, 1]} : vector<16x16x8xf32> to vector<16x10x8xf32>
    %13 = arith.addf %11, %12 : vector<16x10x8xf32>
    %14 = vector.extract_strided_slice %13 {offsets = [0, 0, 0], sizes = [10, 10, 8], strides = [1, 1, 1]} : vector<16x10x8xf32> to vector<10x10x8xf32>
    %15 = vector.extract_strided_slice %13 {offsets = [1, 0, 0], sizes = [10, 10, 8], strides = [1, 1, 1]} : vector<16x10x8xf32> to vector<10x10x8xf32>
    %16 = arith.addf %14, %15 : vector<10x10x8xf32>
    %17 = vector.extract_strided_slice %13 {offsets = [2, 0, 0], sizes = [10, 10, 8], strides = [1, 1, 1]} : vector<16x10x8xf32> to vector<10x10x8xf32>
    %18 = arith.addf %16, %17 : vector<10x10x8xf32>
    %19 = vector.extract_strided_slice %13 {offsets = [3, 0, 0], sizes = [10, 10, 8], strides = [1, 1, 1]} : vector<16x10x8xf32> to vector<10x10x8xf32>
    %20 = arith.addf %18, %19 : vector<10x10x8xf32>
    %21 = vector.extract_strided_slice %13 {offsets = [4, 0, 0], sizes = [10, 10, 8], strides = [1, 1, 1]} : vector<16x10x8xf32> to vector<10x10x8xf32>
    %22 = arith.addf %20, %21 : vector<10x10x8xf32>
    %23 = vector.extract_strided_slice %13 {offsets = [5, 0, 0], sizes = [10, 10, 8], strides = [1, 1, 1]} : vector<16x10x8xf32> to vector<10x10x8xf32>
    %24 = arith.addf %22, %23 : vector<10x10x8xf32>
    %25 = vector.extract_strided_slice %13 {offsets = [6, 0, 0], sizes = [10, 10, 8], strides = [1, 1, 1]} : vector<16x10x8xf32> to vector<10x10x8xf32>
    %26 = arith.addf %24, %25 : vector<10x10x8xf32>
    %cst = arith.constant 0.0204081628 : f32
    %27 = vector.broadcast %cst : f32 to vector<10x10x8xf32>
    %28 = arith.mulf %26, %27 : vector<10x10x8xf32>
    %29 = vector.extract_strided_slice %28 {offsets = [0, 0, 0], sizes = [10, 1, 8], strides = [1, 1, 1]} : vector<10x10x8xf32> to vector<10x1x8xf32>
    %30 = vector.shape_cast %29 : vector<10x1x8xf32> to vector<10x1x8xf32>
    %31 = vector.broadcast %30 : vector<10x1x8xf32> to vector<10x3x8xf32>
    %32 = vector.extract_strided_slice %28 {offsets = [0, 9, 0], sizes = [10, 1, 8], strides = [1, 1, 1]} : vector<10x10x8xf32> to vector<10x1x8xf32>
    %33 = vector.shape_cast %32 : vector<10x1x8xf32> to vector<10x1x8xf32>
    %34 = vector.broadcast %33 : vector<10x1x8xf32> to vector<10x3x8xf32>
    %35 = tpu.concatenate %31, %28, %34 in 1 : vector<10x3x8xf32>, vector<10x10x8xf32>, vector<10x3x8xf32> -> vector<10x16x8xf32>
    %36 = vector.extract_strided_slice %35 {offsets = [0, 0, 0], sizes = [1, 16, 8], strides = [1, 1, 1]} : vector<10x16x8xf32> to vector<1x16x8xf32>
    %37 = vector.shape_cast %36 : vector<1x16x8xf32> to vector<1x16x8xf32>
    %38 = vector.broadcast %37 : vector<1x16x8xf32> to vector<3x16x8xf32>
    %39 = vector.extract_strided_slice %35 {offsets = [9, 0, 0], sizes = [1, 16, 8], strides = [1, 1, 1]} : vector<10x16x8xf32> to vector<1x16x8xf32>
    %40 = vector.shape_cast %39 : vector<1x16x8xf32> to vector<1x16x8xf32>
    %41 = vector.broadcast %40 : vector<1x16x8xf32> to vector<3x16x8xf32>
    %42 = tpu.concatenate %38, %35, %41 in 0 : vector<3x16x8xf32>, vector<10x16x8xf32>, vector<3x16x8xf32> -> vector<16x16x8xf32>
    %c0_2 = arith.constant 0 : index
    %c0_3 = arith.constant 0 : index
    %c0_4 = arith.constant 0 : index
    %43 = vector.load %arg2[%c0_2, %c0_3, %c0_4] : memref<16x16x8xf32, #tpu.memory_space<vmem>>, vector<16x16x8xf32>
    tpu.vector_store %arg2[%c0_2, %c0_3, %c0_4], %42 {strides = array<i32>} : memref<16x16x8xf32, #tpu.memory_space<vmem>>, vector<16x16x8xf32>,
    return
  }
  func.func @transform_0(%arg0: i32) -> (i32, i32, i32) {
    %c0_i32 = arith.constant 0 : i32
    %c0_i32_0 = arith.constant 0 : i32
    %c0_i32_1 = arith.constant 0 : i32
    return %c0_i32, %c0_i32_0, %arg0 : i32, i32, i32
  }
  func.func @transform_1(%arg0: i32) -> (i32, i32, i32) {
    %c0_i32 = arith.constant 0 : i32
    %c0_i32_0 = arith.constant 0 : i32
    %c0_i32_1 = arith.constant 0 : i32
    return %c0_i32, %c0_i32_0, %arg0 : i32, i32, i32
  }
}

</mosaic_0001>

<llo_original>
// kernel: tpu_custom_call.1
$region0: #{tpu_custom_call.1}
  #allocation0 [shape = 'u32[]', space=smem, size = 0x4, offset = 0x4, fixed_abs, tag = 'smem constant byte address 0x4 - core index']
  #allocation1 [shape = 'u32[144,128]{1,0:T(1,128)}', space=vmem, size = 0x12000, scoped, tag = 'internal scratch']
  %s0 = inlined_call_operand.vmem [shape: f32[16,16,8], index: 0, kind: input, shape index: {}]
  %s1 = inlined_call_operand.vmem [shape: f32[16,16,8], index: 1, kind: output, shape index: {}]
  %s2 = sld [smem:[#allocation0]]
  $region14: #{tpu_custom_call.1} parent=0
    _
  %s4 = ssub.s32 1, %s2
  %s5 = scalar_select 0, %s4, %s2
  // Predicated region
  $region2: #{tpu_custom_call.1} parent=0 // pred_check
    _
  $region3: #{tpu_custom_call.1} parent=0 // pred_check_branch
    %7 = sbr.rel (0) target = $region5
  $region4: #{tpu_custom_call.1} parent=0 // pred_region
    _
  $region5: #{tpu_custom_call.1} parent=0 // pred_fallthru
    _
  %v8 = vld [vmem:[%s0] sm:$0xff]
  %v9 = vld [vmem:[%s0 + $0x8] sm:$0xff]
  %v10 = vld [vmem:[%s0 + $0x10] sm:$0xff]
  %v11 = vld [vmem:[%s0 + $0x18] sm:$0xff]
  %v12 = vld [vmem:[%s0 + $0x20] sm:$0xff]
  %v13 = vld [vmem:[%s0 + $0x28] sm:$0xff]
  %v14 = vld [vmem:[%s0 + $0x30] sm:$0xff]
  %v15 = vld [vmem:[%s0 + $0x38] sm:$0xff]
  %v16 = vld [vmem:[%s0 + $0x40] sm:$0xff]
  %v17 = vld [vmem:[%s0 + $0x48] sm:$0xff]
  %v18 = vld [vmem:[%s0 + $0x50] sm:$0xff]
  %v19 = vld [vmem:[%s0 + $0x58] sm:$0xff]
  %v20 = vld [vmem:[%s0 + $0x60] sm:$0xff]
  %v21 = vld [vmem:[%s0 + $0x68] sm:$0xff]
  %v22 = vld [vmem:[%s0 + $0x70] sm:$0xff]
  %v23 = vld [vmem:[%s0 + $0x78] sm:$0xff]
  %v24 = vld [vmem:[%s0 + $0x80] sm:$0xff]
  %v25 = vld [vmem:[%s0 + $0x88] sm:$0xff]
  %v26 = vld [vmem:[%s0 + $0x90] sm:$0xff]
  %v27 = vld [vmem:[%s0 + $0x98] sm:$0xff]
  %v28 = vld [vmem:[%s0 + $0xa0] sm:$0xff]
  %v29 = vld [vmem:[%s0 + $0xa8] sm:$0xff]
  %v30 = vld [vmem:[%s0 + $0xb0] sm:$0xff]
  %v31 = vld [vmem:[%s0 + $0xb8] sm:$0xff]
  %v32 = vld [vmem:[%s0 + $0xc0] sm:$0xff]
  %v33 = vld [vmem:[%s0 + $0xc8] sm:$0xff]
  %v34 = vld [vmem:[%s0 + $0xd0] sm:$0xff]
  %v35 = vld [vmem:[%s0 + $0xd8] sm:$0xff]
  %v36 = vld [vmem:[%s0 + $0xe0] sm:$0xff]
  %v37 = vld [vmem:[%s0 + $0xe8] sm:$0xff]
  %v38 = vld [vmem:[%s0 + $0xf0] sm:$0xff]
  %v39 = vld [vmem:[%s0 + $0xf8] sm:$0xff]
  %vm72 = vcmask 1046528
  %v73 = vrot.slane %v8, 1
  %v74 = vrot.slane %v9, 1
  %v75 = vsel %vm72, %v73, %v74
  %v76 = vrot.slane %v10, 1
  %v77 = vrot.slane %v11, 1
  %v78 = vsel %vm72, %v76, %v77
  %v79 = vrot.slane %v12, 1
  %v80 = vrot.slane %v13, 1
  %v81 = vsel %vm72, %v79, %v80
  %v82 = vrot.slane %v14, 1
  %v83 = vrot.slane %v15, 1
  %v84 = vsel %vm72, %v82, %v83
  %v85 = vrot.slane %v16, 1
  %v86 = vrot.slane %v17, 1
  %v87 = vsel %vm72, %v85, %v86
  %v88 = vrot.slane %v18, 1
  %v89 = vrot.slane %v19, 1
  %v90 = vsel %vm72, %v88, %v89
  %v91 = vrot.slane %v20, 1
  %v92 = vrot.slane %v21, 1
  %v93 = vsel %vm72, %v91, %v92
  %v94 = vrot.slane %v22, 1
  %v95 = vrot.slane %v23, 1
  %v96 = vsel %vm72, %v94, %v95
  %v97 = vrot.slane %v24, 1
  %v98 = vrot.slane %v25, 1
  %v99 = vsel %vm72, %v97, %v98
  %v100 = vrot.slane %v26, 1
  %v101 = vrot.slane %v27, 1
  %v102 = vsel %vm72, %v100, %v101
  %v103 = vrot.slane %v28, 1
  %v104 = vrot.slane %v29, 1
  %v105 = vsel %vm72, %v103, %v104
  %v106 = vrot.slane %v30, 1
  %v107 = vrot.slane %v31, 1
  %v108 = vsel %vm72, %v106, %v107
  %v109 = vrot.slane %v32, 1
  %v110 = vrot.slane %v33, 1
  %v111 = vsel %vm72, %v109, %v110
  %v112 = vrot.slane %v34, 1
  %v113 = vrot.slane %v35, 1
  %v114 = vsel %vm72, %v112, %v113
  %v115 = vrot.slane %v36, 1
  %v116 = vrot.slane %v37, 1
  %v117 = vsel %vm72, %v115, %v116
  %v118 = vrot.slane %v38, 1
  %v119 = vrot.slane %v39, 1
  %v120 = vsel %vm72, %v118, %v119
  %v153 = vadd.f32 %v8, %v75
  %v154 = vadd.f32 %v9, %v74
  %v155 = vadd.f32 %v10, %v78
  %v156 = vadd.f32 %v11, %v77
  %v157 = vadd.f32 %v12, %v81
  %v158 = vadd.f32 %v13, %v80
  %v159 = vadd.f32 %v14, %v84
  %v160 = vadd.f32 %v15, %v83
  %v161 = vadd.f32 %v16, %v87
  %v162 = vadd.f32 %v17, %v86
  %v163 = vadd.f32 %v18, %v90
  %v164 = vadd.f32 %v19, %v89
  %v165 = vadd.f32 %v20, %v93
  %v166 = vadd.f32 %v21, %v92
  %v167 = vadd.f32 %v22, %v96
  %v168 = vadd.f32 %v23, %v95
  %v169 = vadd.f32 %v24, %v99
  %v170 = vadd.f32 %v25, %v98
  %v171 = vadd.f32 %v26, %v102
  %v172 = vadd.f32 %v27, %v101
  %v173 = vadd.f32 %v28, %v105
  %v174 = vadd.f32 %v29, %v104
  %v175 = vadd.f32 %v30, %v108
  %v176 = vadd.f32 %v31, %v107
  %v177 = vadd.f32 %v32, %v111
  %v178 = vadd.f32 %v33, %v110
  %v179 = vadd.f32 %v34, %v114
  %v180 = vadd.f32 %v35, %v113
  %v181 = vadd.f32 %v36, %v117
  %v182 = vadd.f32 %v37, %v116
  %v183 = vadd.f32 %v38, %v120
  %v184 = vadd.f32 %v39, %v119
  %vm185 = vcmask 1045504
  %v186 = vrot.slane %v8, 2
  %v187 = vrot.slane %v9, 2
  %v188 = vsel %vm185, %v186, %v187
  %v189 = vrot.slane %v10, 2
  %v190 = vrot.slane %v11, 2
  %v191 = vsel %vm185, %v189, %v190
  %v192 = vrot.slane %v12, 2
  %v193 = vrot.slane %v13, 2
  %v194 = vsel %vm185, %v192, %v193
  %v195 = vrot.slane %v14, 2
  %v196 = vrot.slane %v15, 2
  %v197 = vsel %vm185, %v195, %v196
  %v198 = vrot.slane %v16, 2
  %v199 = vrot.slane %v17, 2
  %v200 = vsel %vm185, %v198, %v199
  %v201 = vrot.slane %v18, 2
  %v202 = vrot.slane %v19, 2
  %v203 = vsel %vm185, %v201, %v202
  %v204 = vrot.slane %v20, 2
  %v205 = vrot.slane %v21, 2
  %v206 = vsel %vm185, %v204, %v205
  %v207 = vrot.slane %v22, 2
  %v208 = vrot.slane %v23, 2
  %v209 = vsel %vm185, %v207, %v208
  %v210 = vrot.slane %v24, 2
  %v211 = vrot.slane %v25, 2
  %v212 = vsel %vm185, %v210, %v211
  %v213 = vrot.slane %v26, 2
  %v214 = vrot.slane %v27, 2
  %v215 = vsel %vm185, %v213, %v214
  %v216 = vrot.slane %v28, 2
  %v217 = vrot.slane %v29, 2
  %v218 = vsel %vm185, %v216, %v217
  %v219 = vrot.slane %v30, 2
  %v220 = vrot.slane %v31, 2
  %v221 = vsel %vm185, %v219, %v220
  %v222 = vrot.slane %v32, 2
  %v223 = vrot.slane %v33, 2
  %v224 = vsel %vm185, %v222, %v223
  %v225 = vrot.slane %v34, 2
  %v226 = vrot.slane %v35, 2
  %v227 = vsel %vm185, %v225, %v226
  %v228 = vrot.slane %v36, 2
  %v229 = vrot.slane %v37, 2
  %v230 = vsel %vm185, %v228, %v229
  %v231 = vrot.slane %v38, 2
  %v232 = vrot.slane %v39, 2
  %v233 = vsel %vm185, %v231, %v232
  %v266 = vadd.f32 %v153, %v188
  %v267 = vadd.f32 %v154, %v187
  %v268 = vadd.f32 %v155, %v191
  %v269 = vadd.f32 %v156, %v190
  %v270 = vadd.f32 %v157, %v194
  %v271 = vadd.f32 %v158, %v193
  %v272 = vadd.f32 %v159, %v197
  %v273 = vadd.f32 %v160, %v196
  %v274 = vadd.f32 %v161, %v200
  %v275 = vadd.f32 %v162, %v199
  %v276 = vadd.f32 %v163, %v203
  %v277 = vadd.f32 %v164, %v202
  %v278 = vadd.f32 %v165, %v206
  %v279 = vadd.f32 %v166, %v205
  %v280 = vadd.f32 %v167, %v209
  %v281 = vadd.f32 %v168, %v208
  %v282 = vadd.f32 %v169, %v212
  %v283 = vadd.f32 %v170, %v211
  %v284 = vadd.f32 %v171, %v215
  %v285 = vadd.f32 %v172, %v214
  %v286 = vadd.f32 %v173, %v218
  %v287 = vadd.f32 %v174, %v217
  %v288 = vadd.f32 %v175, %v221
  %v289 = vadd.f32 %v176, %v220
  %v290 = vadd.f32 %v177, %v224
  %v291 = vadd.f32 %v178, %v223
  %v292 = vadd.f32 %v179, %v227
  %v293 = vadd.f32 %v180, %v226
  %v294 = vadd.f32 %v181, %v230
  %v295 = vadd.f32 %v182, %v229
  %v296 = vadd.f32 %v183, %v233
  %v297 = vadd.f32 %v184, %v232
  %vm298 = vcmask 1044480
  %v299 = vrot.slane %v8, 3
  %v300 = vrot.slane %v9, 3
  %v301 = vsel %vm298, %v299, %v300
  %v302 = vrot.slane %v10, 3
  %v303 = vrot.slane %v11, 3
  %v304 = vsel %vm298, %v302, %v303
  %v305 = vrot.slane %v12, 3
  %v306 = vrot.slane %v13, 3
  %v307 = vsel %vm298, %v305, %v306
  %v308 = vrot.slane %v14, 3
  %v309 = vrot.slane %v15, 3
  %v310 = vsel %vm298, %v308, %v309
  %v311 = vrot.slane %v16, 3
  %v312 = vrot.slane %v17, 3
  %v313 = vsel %vm298, %v311, %v312
  %v314 = vrot.slane %v18, 3
  %v315 = vrot.slane %v19, 3
  %v316 = vsel %vm298, %v314, %v315
  %v317 = vrot.slane %v20, 3
  %v318 = vrot.slane %v21, 3
  %v319 = vsel %vm298, %v317, %v318
  %v320 = vrot.slane %v22, 3
  %v321 = vrot.slane %v23, 3
  %v322 = vsel %vm298, %v320, %v321
  %v323 = vrot.slane %v24, 3
  %v324 = vrot.slane %v25, 3
  %v325 = vsel %vm298, %v323, %v324
  %v326 = vrot.slane %v26, 3
  %v327 = vrot.slane %v27, 3
  %v328 = vsel %vm298, %v326, %v327
  %v329 = vrot.slane %v28, 3
  %v330 = vrot.slane %v29, 3
  %v331 = vsel %vm298, %v329, %v330
  %v332 = vrot.slane %v30, 3
  %v333 = vrot.slane %v31, 3
  %v334 = vsel %vm298, %v332, %v333
  %v335 = vrot.slane %v32, 3
  %v336 = vrot.slane %v33, 3
  %v337 = vsel %vm298, %v335, %v336
  %v338 = vrot.slane %v34, 3
  %v339 = vrot.slane %v35, 3
  %v340 = vsel %vm298, %v338, %v339
  %v341 = vrot.slane %v36, 3
  %v342 = vrot.slane %v37, 3
  %v343 = vsel %vm298, %v341, %v342
  %v344 = vrot.slane %v38, 3
  %v345 = vrot.slane %v39, 3
  %v346 = vsel %vm298, %v344, %v345
  %v379 = vadd.f32 %v266, %v301
  %v380 = vadd.f32 %v267, %v300
  %v381 = vadd.f32 %v268, %v304
  %v382 = vadd.f32 %v269, %v303
  %v383 = vadd.f32 %v270, %v307
  %v384 = vadd.f32 %v271, %v306
  %v385 = vadd.f32 %v272, %v310
  %v386 = vadd.f32 %v273, %v309
  %v387 = vadd.f32 %v274, %v313
  %v388 = vadd.f32 %v275, %v312
  %v389 = vadd.f32 %v276, %v316
  %v390 = vadd.f32 %v277, %v315
  %v391 = vadd.f32 %v278, %v319
  %v392 = vadd.f32 %v279, %v318
  %v393 = vadd.f32 %v280, %v322
  %v394 = vadd.f32 %v281, %v321
  %v395 = vadd.f32 %v282, %v325
  %v396 = vadd.f32 %v283, %v324
  %v397 = vadd.f32 %v284, %v328
  %v398 = vadd.f32 %v285, %v327
  %v399 = vadd.f32 %v286, %v331
  %v400 = vadd.f32 %v287, %v330
  %v401 = vadd.f32 %v288, %v334
  %v402 = vadd.f32 %v289, %v333
  %v403 = vadd.f32 %v290, %v337
  %v404 = vadd.f32 %v291, %v336
  %v405 = vadd.f32 %v292, %v340
  %v406 = vadd.f32 %v293, %v339
  %v407 = vadd.f32 %v294, %v343
  %v408 = vadd.f32 %v295, %v342
  %v409 = vadd.f32 %v296, %v346
  %v410 = vadd.f32 %v297, %v345
  %vm411 = vcmask 1043456
  %v412 = vrot.slane %v8, 4
  %v413 = vrot.slane %v9, 4
  %v414 = vsel %vm411, %v412, %v413
  %v415 = vrot.slane %v10, 4
  %v416 = vrot.slane %v11, 4
  %v417 = vsel %vm411, %v415, %v416
  %v418 = vrot.slane %v12, 4
  %v419 = vrot.slane %v13, 4
  %v420 = vsel %vm411, %v418, %v419
  %v421 = vrot.slane %v14, 4
  %v422 = vrot.slane %v15, 4
  %v423 = vsel %vm411, %v421, %v422
  %v424 = vrot.slane %v16, 4
  %v425 = vrot.slane %v17, 4
  %v426 = vsel %vm411, %v424, %v425
  %v427 = vrot.slane %v18, 4
  %v428 = vrot.slane %v19, 4
  %v429 = vsel %vm411, %v427, %v428
  %v430 = vrot.slane %v20, 4
  %v431 = vrot.slane %v21, 4
  %v432 = vsel %vm411, %v430, %v431
  %v433 = vrot.slane %v22, 4
  %v434 = vrot.slane %v23, 4
  %v435 = vsel %vm411, %v433, %v434
  %v436 = vrot.slane %v24, 4
  %v437 = vrot.slane %v25, 4
  %v438 = vsel %vm411, %v436, %v437
  %v439 = vrot.slane %v26, 4
  %v440 = vrot.slane %v27, 4
  %v441 = vsel %vm411, %v439, %v440
  %v442 = vrot.slane %v28, 4
  %v443 = vrot.slane %v29, 4
  %v444 = vsel %vm411, %v442, %v443
  %v445 = vrot.slane %v30, 4
  %v446 = vrot.slane %v31, 4
  %v447 = vsel %vm411, %v445, %v446
  %v448 = vrot.slane %v32, 4
  %v449 = vrot.slane %v33, 4
  %v450 = vsel %vm411, %v448, %v449
  %v451 = vrot.slane %v34, 4
  %v452 = vrot.slane %v35, 4
  %v453 = vsel %vm411, %v451, %v452
  %v454 = vrot.slane %v36, 4
  %v455 = vrot.slane %v37, 4
  %v456 = vsel %vm411, %v454, %v455
  %v457 = vrot.slane %v38, 4
  %v458 = vrot.slane %v39, 4
  %v459 = vsel %vm411, %v457, %v458
  %v492 = vadd.f32 %v379, %v414
  %v493 = vadd.f32 %v380, %v413
  %v494 = vadd.f32 %v381, %v417
  %v495 = vadd.f32 %v382, %v416
  %v496 = vadd.f32 %v383, %v420
  %v497 = vadd.f32 %v384, %v419
  %v498 = vadd.f32 %v385, %v423
  %v499 = vadd.f32 %v386, %v422
  %v500 = vadd.f32 %v387, %v426
  %v501 = vadd.f32 %v388, %v425
  %v502 = vadd.f32 %v389, %v429
  %v503 = vadd.f32 %v390, %v428
  %v504 = vadd.f32 %v391, %v432
  %v505 = vadd.f32 %v392, %v431
  %v506 = vadd.f32 %v393, %v435
  %v507 = vadd.f32 %v394, %v434
  %v508 = vadd.f32 %v395, %v438
  %v509 = vadd.f32 %v396, %v437
  %v510 = vadd.f32 %v397, %v441
  %v511 = vadd.f32 %v398, %v440
  %v512 = vadd.f32 %v399, %v444
  %v513 = vadd.f32 %v400, %v443
  %v514 = vadd.f32 %v401, %v447
  %v515 = vadd.f32 %v402, %v446
  %v516 = vadd.f32 %v403, %v450
  %v517 = vadd.f32 %v404, %v449
  %v518 = vadd.f32 %v405, %v453
  %v519 = vadd.f32 %v406, %v452
  %v520 = vadd.f32 %v407, %v456
  %v521 = vadd.f32 %v408, %v455
  %v522 = vadd.f32 %v409, %v459
  %v523 = vadd.f32 %v410, %v458
  %vm524 = vcmask 1042432
  %v525 = vrot.slane %v8, 5
  %v526 = vrot.slane %v9, 5
  %v527 = vsel %vm524, %v525, %v526
  %v528 = vrot.slane %v10, 5
  %v529 = vrot.slane %v11, 5
  %v530 = vsel %vm524, %v528, %v529
  %v531 = vrot.slane %v12, 5
  %v532 = vrot.slane %v13, 5
  %v533 = vsel %vm524, %v531, %v532
  %v534 = vrot.slane %v14, 5
  %v535 = vrot.slane %v15, 5
  %v536 = vsel %vm524, %v534, %v535
  %v537 = vrot.slane %v16, 5
  %v538 = vrot.slane %v17, 5
  %v539 = vsel %vm524, %v537, %v538
  %v540 = vrot.slane %v18, 5
  %v541 = vrot.slane %v19, 5
  %v542 = vsel %vm524, %v540, %v541
  %v543 = vrot.slane %v20, 5
  %v544 = vrot.slane %v21, 5
  %v545 = vsel %vm524, %v543, %v544
  %v546 = vrot.slane %v22, 5
  %v547 = vrot.slane %v23, 5
  %v548 = vsel %vm524, %v546, %v547
  %v549 = vrot.slane %v24, 5
  %v550 = vrot.slane %v25, 5
  %v551 = vsel %vm524, %v549, %v550
  %v552 = vrot.slane %v26, 5
  %v553 = vrot.slane %v27, 5
  %v554 = vsel %vm524, %v552, %v553
  %v555 = vrot.slane %v28, 5
  %v556 = vrot.slane %v29, 5
  %v557 = vsel %vm524, %v555, %v556
  %v558 = vrot.slane %v30, 5
  %v559 = vrot.slane %v31, 5
  %v560 = vsel %vm524, %v558, %v559
  %v561 = vrot.slane %v32, 5
  %v562 = vrot.slane %v33, 5
  %v563 = vsel %vm524, %v561, %v562
  %v564 = vrot.slane %v34, 5
  %v565 = vrot.slane %v35, 5
  %v566 = vsel %vm524, %v564, %v565
  %v567 = vrot.slane %v36, 5
  %v568 = vrot.slane %v37, 5
  %v569 = vsel %vm524, %v567, %v568
  %v570 = vrot.slane %v38, 5
  %v571 = vrot.slane %v39, 5
  %v572 = vsel %vm524, %v570, %v571
  %v605 = vadd.f32 %v492, %v527
  %v606 = vadd.f32 %v493, %v526
  %v607 = vadd.f32 %v494, %v530
  %v608 = vadd.f32 %v495, %v529
  %v609 = vadd.f32 %v496, %v533
  %v610 = vadd.f32 %v497, %v532
  %v611 = vadd.f32 %v498, %v536
  %v612 = vadd.f32 %v499, %v535
  %v613 = vadd.f32 %v500, %v539
  %v614 = vadd.f32 %v501, %v538
  %v615 = vadd.f32 %v502, %v542
  %v616 = vadd.f32 %v503, %v541
  %v617 = vadd.f32 %v504, %v545
  %v618 = vadd.f32 %v505, %v544
  %v619 = vadd.f32 %v506, %v548
  %v620 = vadd.f32 %v507, %v547
  %v621 = vadd.f32 %v508, %v551
  %v622 = vadd.f32 %v509, %v550
  %v623 = vadd.f32 %v510, %v554
  %v624 = vadd.f32 %v511, %v553
  %v625 = vadd.f32 %v512, %v557
  %v626 = vadd.f32 %v513, %v556
  %v627 = vadd.f32 %v514, %v560
  %v628 = vadd.f32 %v515, %v559
  %v629 = vadd.f32 %v516, %v563
  %v630 = vadd.f32 %v517, %v562
  %v631 = vadd.f32 %v518, %v566
  %v632 = vadd.f32 %v519, %v565
  %v633 = vadd.f32 %v520, %v569
  %v634 = vadd.f32 %v521, %v568
  %v635 = vadd.f32 %v522, %v572
  %v636 = vadd.f32 %v523, %v571
  %vm637 = vcmask 1041408
  %v638 = vrot.slane %v8, 6
  %v639 = vrot.slane %v9, 6
  %v640 = vsel %vm637, %v638, %v639
  %v641 = vrot.slane %v10, 6
  %v642 = vrot.slane %v11, 6
  %v643 = vsel %vm637, %v641, %v642
  %v644 = vrot.slane %v12, 6
  %v645 = vrot.slane %v13, 6
  %v646 = vsel %vm637, %v644, %v645
  %v647 = vrot.slane %v14, 6
  %v648 = vrot.slane %v15, 6
  %v649 = vsel %vm637, %v647, %v648
  %v650 = vrot.slane %v16, 6
  %v651 = vrot.slane %v17, 6
  %v652 = vsel %vm637, %v650, %v651
  %v653 = vrot.slane %v18, 6
  %v654 = vrot.slane %v19, 6
  %v655 = vsel %vm637, %v653, %v654
  %v656 = vrot.slane %v20, 6
  %v657 = vrot.slane %v21, 6
  %v658 = vsel %vm637, %v656, %v657
  %v659 = vrot.slane %v22, 6
  %v660 = vrot.slane %v23, 6
  %v661 = vsel %vm637, %v659, %v660
  %v662 = vrot.slane %v24, 6
  %v663 = vrot.slane %v25, 6
  %v664 = vsel %vm637, %v662, %v663
  %v665 = vrot.slane %v26, 6
  %v666 = vrot.slane %v27, 6
  %v667 = vsel %vm637, %v665, %v666
  %v668 = vrot.slane %v28, 6
  %v669 = vrot.slane %v29, 6
  %v670 = vsel %vm637, %v668, %v669
  %v671 = vrot.slane %v30, 6
  %v672 = vrot.slane %v31, 6
  %v673 = vsel %vm637, %v671, %v672
  %v674 = vrot.slane %v32, 6
  %v675 = vrot.slane %v33, 6
  %v676 = vsel %vm637, %v674, %v675
  %v677 = vrot.slane %v34, 6
  %v678 = vrot.slane %v35, 6
  %v679 = vsel %vm637, %v677, %v678
  %v680 = vrot.slane %v36, 6
  %v681 = vrot.slane %v37, 6
  %v682 = vsel %vm637, %v680, %v681
  %v683 = vrot.slane %v38, 6
  %v684 = vrot.slane %v39, 6
  %v685 = vsel %vm637, %v683, %v684
  %v718 = vadd.f32 %v605, %v640
  %v719 = vadd.f32 %v606, %v639
  %v720 = vadd.f32 %v607, %v643
  %v721 = vadd.f32 %v608, %v642
  %v722 = vadd.f32 %v609, %v646
  %v723 = vadd.f32 %v610, %v645
  %v724 = vadd.f32 %v611, %v649
  %v725 = vadd.f32 %v612, %v648
  %v726 = vadd.f32 %v613, %v652
  %v727 = vadd.f32 %v614, %v651
  %v728 = vadd.f32 %v615, %v655
  %v729 = vadd.f32 %v616, %v654
  %v730 = vadd.f32 %v617, %v658
  %v731 = vadd.f32 %v618, %v657
  %v732 = vadd.f32 %v619, %v661
  %v733 = vadd.f32 %v620, %v660
  %v734 = vadd.f32 %v621, %v664
  %v735 = vadd.f32 %v622, %v663
  %v736 = vadd.f32 %v623, %v667
  %v737 = vadd.f32 %v624, %v666
  %v738 = vadd.f32 %v625, %v670
  %v739 = vadd.f32 %v626, %v669
  %v740 = vadd.f32 %v627, %v673
  %v741 = vadd.f32 %v628, %v672
  %v742 = vadd.f32 %v629, %v676
  %v743 = vadd.f32 %v630, %v675
  %v744 = vadd.f32 %v631, %v679
  %v745 = vadd.f32 %v632, %v678
  %v746 = vadd.f32 %v633, %v682
  %v747 = vadd.f32 %v634, %v681
  %v748 = vadd.f32 %v635, %v685
  %v749 = vadd.f32 %v636, %v684
  %v750 = vadd.f32 %v718, %v720
  %v751 = vadd.f32 %v719, %v721
  %v752 = vadd.f32 %v720, %v722
  %v753 = vadd.f32 %v721, %v723
  %v754 = vadd.f32 %v722, %v724
  %v755 = vadd.f32 %v723, %v725
  %v756 = vadd.f32 %v724, %v726
  %v757 = vadd.f32 %v725, %v727
  %v758 = vadd.f32 %v726, %v728
  %v759 = vadd.f32 %v727, %v729
  %v760 = vadd.f32 %v728, %v730
  %v761 = vadd.f32 %v729, %v731
  %v762 = vadd.f32 %v730, %v732
  %v763 = vadd.f32 %v731, %v733
  %v764 = vadd.f32 %v732, %v734
  %v765 = vadd.f32 %v733, %v735
  %v766 = vadd.f32 %v734, %v736
  %v767 = vadd.f32 %v735, %v737
  %v768 = vadd.f32 %v736, %v738
  %v769 = vadd.f32 %v737, %v739
  %v770 = vadd.f32 %v750, %v722
  %v771 = vadd.f32 %v751, %v723
  %v772 = vadd.f32 %v752, %v724
  %v773 = vadd.f32 %v753, %v725
  %v774 = vadd.f32 %v754, %v726
  %v775 = vadd.f32 %v755, %v727
  %v776 = vadd.f32 %v756, %v728
  %v777 = vadd.f32 %v757, %v729
  %v778 = vadd.f32 %v758, %v730
  %v779 = vadd.f32 %v759, %v731
  %v780 = vadd.f32 %v760, %v732
  %v781 = vadd.f32 %v761, %v733
  %v782 = vadd.f32 %v762, %v734
  %v783 = vadd.f32 %v763, %v735
  %v784 = vadd.f32 %v764, %v736
  %v785 = vadd.f32 %v765, %v737
  %v786 = vadd.f32 %v766, %v738
  %v787 = vadd.f32 %v767, %v739
  %v788 = vadd.f32 %v768, %v740
  %v789 = vadd.f32 %v769, %v741
  %v790 = vadd.f32 %v770, %v724
  %v791 = vadd.f32 %v771, %v725
  %v792 = vadd.f32 %v772, %v726
  %v793 = vadd.f32 %v773, %v727
  %v794 = vadd.f32 %v774, %v728
  %v795 = vadd.f32 %v775, %v729
  %v796 = vadd.f32 %v776, %v730
  %v797 = vadd.f32 %v777, %v731
  %v798 = vadd.f32 %v778, %v732
  %v799 = vadd.f32 %v779, %v733
  %v800 = vadd.f32 %v780, %v734
  %v801 = vadd.f32 %v781, %v735
  %v802 = vadd.f32 %v782, %v736
  %v803 = vadd.f32 %v783, %v737
  %v804 = vadd.f32 %v784, %v738
  %v805 = vadd.f32 %v785, %v739
  %v806 = vadd.f32 %v786, %v740
  %v807 = vadd.f32 %v787, %v741
  %v808 = vadd.f32 %v788, %v742
  %v809 = vadd.f32 %v789, %v743
  %v810 = vadd.f32 %v790, %v726
  %v811 = vadd.f32 %v791, %v727
  %v812 = vadd.f32 %v792, %v728
  %v813 = vadd.f32 %v793, %v729
  %v814 = vadd.f32 %v794, %v730
  %v815 = vadd.f32 %v795, %v731
  %v816 = vadd.f32 %v796, %v732
  %v817 = vadd.f32 %v797, %v733
  %v818 = vadd.f32 %v798, %v734
  %v819 = vadd.f32 %v799, %v735
  %v820 = vadd.f32 %v800, %v736
  %v821 = vadd.f32 %v801, %v737
  %v822 = vadd.f32 %v802, %v738
  %v823 = vadd.f32 %v803, %v739
  %v824 = vadd.f32 %v804, %v740
  %v825 = vadd.f32 %v805, %v741
  %v826 = vadd.f32 %v806, %v742
  %v827 = vadd.f32 %v807, %v743
  %v828 = vadd.f32 %v808, %v744
  %v829 = vadd.f32 %v809, %v745
  %v830 = vadd.f32 %v810, %v728
  %v831 = vadd.f32 %v811, %v729
  %v832 = vadd.f32 %v812, %v730
  %v833 = vadd.f32 %v813, %v731
  %v834 = vadd.f32 %v814, %v732
  %v835 = vadd.f32 %v815, %v733
  %v836 = vadd.f32 %v816, %v734
  %v837 = vadd.f32 %v817, %v735
  %v838 = vadd.f32 %v818, %v736
  %v839 = vadd.f32 %v819, %v737
  %v840 = vadd.f32 %v820, %v738
  %v841 = vadd.f32 %v821, %v739
  %v842 = vadd.f32 %v822, %v740
  %v843 = vadd.f32 %v823, %v741
  %v844 = vadd.f32 %v824, %v742
  %v845 = vadd.f32 %v825, %v743
  %v846 = vadd.f32 %v826, %v744
  %v847 = vadd.f32 %v827, %v745
  %v848 = vadd.f32 %v828, %v746
  %v849 = vadd.f32 %v829, %v747
  %v850 = vadd.f32 %v830, %v730
  %v851 = vadd.f32 %v831, %v731
  %v852 = vadd.f32 %v832, %v732
  %v853 = vadd.f32 %v833, %v733
  %v854 = vadd.f32 %v834, %v734
  %v855 = vadd.f32 %v835, %v735
  %v856 = vadd.f32 %v836, %v736
  %v857 = vadd.f32 %v837, %v737
  %v858 = vadd.f32 %v838, %v738
  %v859 = vadd.f32 %v839, %v739
  %v860 = vadd.f32 %v840, %v740
  %v861 = vadd.f32 %v841, %v741
  %v862 = vadd.f32 %v842, %v742
  %v863 = vadd.f32 %v843, %v743
  %v864 = vadd.f32 %v844, %v744
  %v865 = vadd.f32 %v845, %v745
  %v866 = vadd.f32 %v846, %v746
  %v867 = vadd.f32 %v847, %v747
  %v868 = vadd.f32 %v848, %v748
  %v869 = vadd.f32 %v849, %v749
  %v870 = vmul.f32 %v850, 0.020408163
  %v871 = vmul.f32 %v851, 0.020408163
  %v872 = vmul.f32 %v852, 0.020408163
  %v873 = vmul.f32 %v853, 0.020408163
  %v874 = vmul.f32 %v854, 0.020408163
  %v875 = vmul.f32 %v855, 0.020408163
  %v876 = vmul.f32 %v856, 0.020408163
  %v877 = vmul.f32 %v857, 0.020408163
  %v878 = vmul.f32 %v858, 0.020408163
  %v879 = vmul.f32 %v859, 0.020408163
  %v880 = vmul.f32 %v860, 0.020408163
  %v881 = vmul.f32 %v861, 0.020408163
  %v882 = vmul.f32 %v862, 0.020408163
  %v883 = vmul.f32 %v863, 0.020408163
  %v884 = vmul.f32 %v864, 0.020408163
  %v885 = vmul.f32 %v865, 0.020408163
  %v886 = vmul.f32 %v866, 0.020408163
  %v887 = vmul.f32 %v867, 0.020408163
  %v888 = vmul.f32 %v868, 0.020408163
  %v889 = vmul.f32 %v869, 0.020408163
  %v890 = vlaneseq
  %v891 = vshrl.u32 %v890, 7
  %v892 = vsub.s32 0, %v891
  %v893 = vrot.slane %v870, %v892
  %v894 = vlaneseq
  %v895 = vshrl.u32 %v894, 7
  %v896 = vsub.s32 0, %v895
  %v897 = vrot.slane %v872, %v896
  %v898 = vlaneseq
  %v899 = vshrl.u32 %v898, 7
  %v900 = vsub.s32 0, %v899
  %v901 = vrot.slane %v874, %v900
  %v902 = vlaneseq
  %v903 = vshrl.u32 %v902, 7
  %v904 = vsub.s32 0, %v903
  %v905 = vrot.slane %v876, %v904
  %v906 = vlaneseq
  %v907 = vshrl.u32 %v906, 7
  %v908 = vsub.s32 0, %v907
  %v909 = vrot.slane %v878, %v908
  %v910 = vlaneseq
  %v911 = vshrl.u32 %v910, 7
  %v912 = vsub.s32 0, %v911
  %v913 = vrot.slane %v880, %v912
  %v914 = vlaneseq
  %v915 = vshrl.u32 %v914, 7
  %v916 = vsub.s32 0, %v915
  %v917 = vrot.slane %v882, %v916
  %v918 = vlaneseq
  %v919 = vshrl.u32 %v918, 7
  %v920 = vsub.s32 0, %v919
  %v921 = vrot.slane %v884, %v920
  %v922 = vlaneseq
  %v923 = vshrl.u32 %v922, 7
  %v924 = vsub.s32 0, %v923
  %v925 = vrot.slane %v886, %v924
  %v926 = vlaneseq
  %v927 = vshrl.u32 %v926, 7
  %v928 = vsub.s32 0, %v927
  %v929 = vrot.slane %v888, %v928
  %v930 = vlaneseq
  %v931 = vshrl.u32 %v930, 7
  %v932 = vsub.s32 1, %v931
  %v933 = vrot.slane %v871, %v932
  %v934 = vlaneseq
  %v935 = vshrl.u32 %v934, 7
  %v936 = vsub.s32 1, %v935
  %v937 = vrot.slane %v873, %v936
  %v938 = vlaneseq
  %v939 = vshrl.u32 %v938, 7
  %v940 = vsub.s32 1, %v939
  %v941 = vrot.slane %v875, %v940
  %v942 = vlaneseq
  %v943 = vshrl.u32 %v942, 7
  %v944 = vsub.s32 1, %v943
  %v945 = vrot.slane %v877, %v944
  %v946 = vlaneseq
  %v947 = vshrl.u32 %v946, 7
  %v948 = vsub.s32 1, %v947
  %v949 = vrot.slane %v879, %v948
  %v950 = vlaneseq
  %v951 = vshrl.u32 %v950, 7
  %v952 = vsub.s32 1, %v951
  %v953 = vrot.slane %v881, %v952
  %v954 = vlaneseq
  %v955 = vshrl.u32 %v954, 7
  %v956 = vsub.s32 1, %v955
  %v957 = vrot.slane %v883, %v956
  %v958 = vlaneseq
  %v959 = vshrl.u32 %v958, 7
  %v960 = vsub.s32 1, %v959
  %v961 = vrot.slane %v885, %v960
  %v962 = vlaneseq
  %v963 = vshrl.u32 %v962, 7
  %v964 = vsub.s32 1, %v963
  %v965 = vrot.slane %v887, %v964
  %v966 = vlaneseq
  %v967 = vshrl.u32 %v966, 7
  %v968 = vsub.s32 1, %v967
  %v969 = vrot.slane %v889, %v968
  %v990 = vrot.slane %v870, 5
  %v991 = vrot.slane %v871, 5
  %v992 = vsel %vm524, %v990, %v991
  %v993 = vrot.slane %v872, 5
  %v994 = vrot.slane %v873, 5
  %v995 = vsel %vm524, %v993, %v994
  %v996 = vrot.slane %v874, 5
  %v997 = vrot.slane %v875, 5
  %v998 = vsel %vm524, %v996, %v997
  %v999 = vrot.slane %v876, 5
  %v1000 = vrot.slane %v877, 5
  %v1001 = vsel %vm524, %v999, %v1000
  %v1002 = vrot.slane %v878, 5
  %v1003 = vrot.slane %v879, 5
  %v1004 = vsel %vm524, %v1002, %v1003
  %v1005 = vrot.slane %v880, 5
  %v1006 = vrot.slane %v881, 5
  %v1007 = vsel %vm524, %v1005, %v1006
  %v1008 = vrot.slane %v882, 5
  %v1009 = vrot.slane %v883, 5
  %v1010 = vsel %vm524, %v1008, %v1009
  %v1011 = vrot.slane %v884, 5
  %v1012 = vrot.slane %v885, 5
  %v1013 = vsel %vm524, %v1011, %v1012
  %v1014 = vrot.slane %v886, 5
  %v1015 = vrot.slane %v887, 5
  %v1016 = vsel %vm524, %v1014, %v1015
  %v1017 = vrot.slane %v888, 5
  %v1018 = vrot.slane %v889, 5
  %v1019 = vsel %vm524, %v1017, %v1018
  %v1040 = vsel %vm524, %v893, %v990
  %v1041 = vsel %vm524, %v897, %v993
  %v1042 = vsel %vm524, %v901, %v996
  %v1043 = vsel %vm524, %v905, %v999
  %v1044 = vsel %vm524, %v909, %v1002
  %v1045 = vsel %vm524, %v913, %v1005
  %v1046 = vsel %vm524, %v917, %v1008
  %v1047 = vsel %vm524, %v921, %v1011
  %v1048 = vsel %vm524, %v925, %v1014
  %v1049 = vsel %vm524, %v929, %v1017
  %v1050 = vsel %vm298, %v992, %v933
  %v1051 = vsel %vm298, %v995, %v937
  %v1052 = vsel %vm298, %v998, %v941
  %v1053 = vsel %vm298, %v1001, %v945
  %v1054 = vsel %vm298, %v1004, %v949
  %v1055 = vsel %vm298, %v1007, %v953
  %v1056 = vsel %vm298, %v1010, %v957
  %v1057 = vsel %vm298, %v1013, %v961
  %v1058 = vsel %vm298, %v1016, %v965
  %v1059 = vsel %vm298, %v1019, %v969
  %vm1060 = vcmask 64512
  %1061 = vst.msk [vmem:[%s1] sm:$0xff] %vm1060, %v1040
  %1062 = vst.msk [vmem:[%s1 + $0x8] sm:$0xff] %vm1060, %v1050
  %1063 = vst.msk [vmem:[%s1 + $0x10] sm:$0xff] %vm1060, %v1040
  %1064 = vst.msk [vmem:[%s1 + $0x18] sm:$0xff] %vm1060, %v1050
  %1065 = vst.msk [vmem:[%s1 + $0x20] sm:$0xff] %vm1060, %v1040
  %1066 = vst.msk [vmem:[%s1 + $0x28] sm:$0xff] %vm1060, %v1050
  %1067 = vst.msk [vmem:[%s1 + $0x30] sm:$0xff] %vm1060, %v1040
  %1068 = vst.msk [vmem:[%s1 + $0x38] sm:$0xff] %vm1060, %v1050
  %1069 = vst.msk [vmem:[%s1 + $0x40] sm:$0xff] %vm1060, %v1041
  %1070 = vst.msk [vmem:[%s1 + $0x48] sm:$0xff] %vm1060, %v1051
  %1071 = vst.msk [vmem:[%s1 + $0x50] sm:$0xff] %vm1060, %v1042
  %1072 = vst.msk [vmem:[%s1 + $0x58] sm:$0xff] %vm1060, %v1052
  %1073 = vst.msk [vmem:[%s1 + $0x60] sm:$0xff] %vm1060, %v1043
  %1074 = vst.msk [vmem:[%s1 + $0x68] sm:$0xff] %vm1060, %v1053
  %1075 = vst.msk [vmem:[%s1 + $0x70] sm:$0xff] %vm1060, %v1044
  %1076 = vst.msk [vmem:[%s1 + $0x78] sm:$0xff] %vm1060, %v1054
  %1077 = vst.msk [vmem:[%s1 + $0x80] sm:$0xff] %vm1060, %v1045
  %1078 = vst.msk [vmem:[%s1 + $0x88] sm:$0xff] %vm1060, %v1055
  %1079 = vst.msk [vmem:[%s1 + $0x90] sm:$0xff] %vm1060, %v1046
  %1080 = vst.msk [vmem:[%s1 + $0x98] sm:$0xff] %vm1060, %v1056
  %1081 = vst.msk [vmem:[%s1 + $0xa0] sm:$0xff] %vm1060, %v1047
  %1082 = vst.msk [vmem:[%s1 + $0xa8] sm:$0xff] %vm1060, %v1057
  %1083 = vst.msk [vmem:[%s1 + $0xb0] sm:$0xff] %vm1060, %v1048
  %1084 = vst.msk [vmem:[%s1 + $0xb8] sm:$0xff] %vm1060, %v1058
  %1085 = vst.msk [vmem:[%s1 + $0xc0] sm:$0xff] %vm1060, %v1049
  %1086 = vst.msk [vmem:[%s1 + $0xc8] sm:$0xff] %vm1060, %v1059
  %1087 = vst.msk [vmem:[%s1 + $0xd0] sm:$0xff] %vm1060, %v1049
  %1088 = vst.msk [vmem:[%s1 + $0xd8] sm:$0xff] %vm1060, %v1059
  %1089 = vst.msk [vmem:[%s1 + $0xe0] sm:$0xff] %vm1060, %v1049
  %1090 = vst.msk [vmem:[%s1 + $0xe8] sm:$0xff] %vm1060, %v1059
  %1091 = vst.msk [vmem:[%s1 + $0xf0] sm:$0xff] %vm1060, %v1049
  %1092 = vst.msk [vmem:[%s1 + $0xf8] sm:$0xff] %vm1060, %v1059
  // Predicated region
  $region6: #{tpu_custom_call.1} parent=0 // pred_check
    _
  $region7: #{tpu_custom_call.1} parent=0 // pred_check_branch
    %1094 = sbr.rel (0) target = $region9
  $region8: #{tpu_custom_call.1} parent=0 // pred_region
    _
  $region9: #{tpu_custom_call.1} parent=0 // pred_fallthru
    _
  // Predicated region
  $region10: #{tpu_custom_call.1} parent=0 // pred_check
    _
  $region11: #{tpu_custom_call.1} parent=0 // pred_check_branch
    %1096 = sbr.rel (0) target = $region13
  $region12: #{tpu_custom_call.1} parent=0 // pred_region
    _
  $region13: #{tpu_custom_call.1} parent=0 // pred_fallthru
    _

</llo_original>
